<compile_context>
chip_gen: v7x
topology: tpu7x:2x2x1
jax: 0.10.0
libtpu: 0.0.40
codegen_flags: <defaults>
</compile_context>

<pallas_src>
import jax
import jax.numpy as jnp
from jax.experimental import pallas as pl
from jax.experimental.pallas import tpu as pltpu


_VMEM_TILE_BUDGET = 24 * 1024 * 1024   # v7x-safe per-tile working-set budget
_VMEM_LIMIT_BYTES = 32 * 1024 * 1024   # raise v5e's 16 MiB scoped default


def _round_up(n, m):
    return ((n + m - 1) // m) * m


def _lane_pad(n):
    return _round_up(max(n, 1), 128)


def _tile_vmem_bytes(tb, d):
    """Rough per-grid-step VMEM working set (bytes) for a (tb, d) f32 x tile."""
    x_bytes = 2 * tb * _lane_pad(d) * 4        # f32 x tile, double-buffered
    h1_bytes = tb * 256 * (4 + 2)              # f32 h1 + bf16 copy fed to fc2
    h2_bytes = tb * 128 * 4                    # f32 h2
    out_bytes = 2 * tb * 128 * 4               # (tb,1) f32 out, lane-padded, 2 bufs
    w_bytes = (_lane_pad(d) * 256 + 256 * 128) * 2 + 4 * 1024  # resident weights
    return x_bytes + h1_bytes + h2_bytes + out_bytes + w_bytes


def _resident_spec(shape):
    """Constant-index (VMEM-resident) spec; single-buffered when supported."""
    idx = lambda i: (0, 0)
    try:
        return pl.BlockSpec(shape, idx, pipeline_mode=pl.Buffered(1))
    except (AttributeError, TypeError):
        return pl.BlockSpec(shape, idx)


def _mlp_kernel(x_ref, w1_ref, b1_ref, w2_ref, b2_ref, w3_ref, b3_ref, o_ref):
    # In-kernel cast of the streamed x tile (VPU; avoids a wrapper-side HBM pass).
    xb = x_ref[...].astype(jnp.bfloat16)
    # fc1: bf16 x bf16 -> f32 accumulate, bias + ReLU in f32.
    h1 = jnp.dot(xb, w1_ref[...], preferred_element_type=jnp.float32)
    h1 = jnp.maximum(h1 + b1_ref[...], 0.0)
    # Dropout(p=0.2): identity in eval/inference semantics.
    # fc2: cast activations back to bf16 to keep the MXU in bf16 mode.
    h2 = jnp.dot(h1.astype(jnp.bfloat16), w2_ref[...],
                 preferred_element_type=jnp.float32)
    h2 = jnp.maximum(h2 + b2_ref[...], 0.0)
    # out layer: N=1 -> VPU broadcast-multiply + lane reduction (skip the MXU).
    o = jnp.sum(h2 * w3_ref[...], axis=-1, keepdims=True) + b3_ref[...]
    o_ref[...] = o.astype(o_ref.dtype)


def delay_predictor_wide_nn(x, params, *, block_b=2048, core_parallel=False):
    """Forward pass of DelayPredictorWideNN via a fused, batch-tiled Pallas kernel.

    x:      [B, input_dim] float32 (cast to bf16 inside the kernel)
    params: output of prepare_params(): w1 bf16 [D,256], b1 f32 [1,256],
            w2 bf16 [256,128], b2 f32 [1,128], w3 f32 [1,128], b3 f32 [1,1].
    core_parallel: set True on v7x to split the batch grid across both
            TensorCores (pltpu.CORE_PARALLEL); no effect on v5e/v6e.
    returns: [B, 1] float32
    """
    B, D = x.shape

    # Batch tile: big (default 2048, multiple of 256 -> fills the MXU and
    # amortizes per-step overhead), rounded to a multiple of 16, clamped by a
    # v7x-safe VMEM budget for large input_dim.
    TB = min(block_b, _round_up(B, 16))
    TB = _round_up(TB, 16)
    while TB > 256 and _tile_vmem_bytes(TB, D) > _VMEM_TILE_BUDGET:
        TB = max(256, TB // 2)

    grid = (pl.cdiv(B, TB),)   # ragged last tile handled by partial-block masking

    w1, b1 = params["w1"], params["b1"]
    w2, b2 = params["w2"], params["b2"]
    w3, b3 = params["w3"], params["b3"]

    in_specs = [
        pl.BlockSpec((TB, D), lambda i: (i, 0)),   # x: streamed / double-buffered
        _resident_spec(w1.shape),                  # weights: VMEM-resident
        _resident_spec(b1.shape),
        _resident_spec(w2.shape),
        _resident_spec(b2.shape),
        _resident_spec(w3.shape),
        _resident_spec(b3.shape),
    ]
    out_spec = pl.BlockSpec((TB, 1), lambda i: (i, 0))

    if core_parallel:
        sem = (getattr(pltpu, "CORE_PARALLEL", "parallel"),)
    else:
        sem = ("parallel",)

    return pl.pallas_call(
        _mlp_kernel,
        out_shape=jax.ShapeDtypeStruct((B, 1), jnp.float32),
        grid=grid,
        in_specs=in_specs,
        out_specs=out_spec,
        compiler_params=pltpu.CompilerParams(
            dimension_semantics=sem,
            vmem_limit_bytes=_VMEM_LIMIT_BYTES),
    )(x, w1, b1, w2, b2, w3, b3)


def init_params(key, input_dim):
    """Raw f32 params mimicking torch.nn.Linear default init (U(-1/sqrt(fan_in), +)).

    Weights are stored transposed as [in, out] so the kernel computes x @ W.
    """
    def linear(k, fan_in, fan_out):
        kw, kb = jax.random.split(k)
        bound = 1.0 / jnp.sqrt(jnp.float32(fan_in))
        w = jax.random.uniform(kw, (fan_in, fan_out), jnp.float32, -bound, bound)
        b = jax.random.uniform(kb, (fan_out,), jnp.float32, -bound, bound)
        return w, b

    k1, k2, k3 = jax.random.split(key, 3)
    w1, b1 = linear(k1, input_dim, 256)
    w2, b2 = linear(k2, 256, 128)
    w3, b3 = linear(k3, 128, 1)
    return {"w1": w1, "b1": b1, "w2": w2, "b2": b2, "w3": w3, "b3": b3}


def prepare_params(raw):
    """One-time conversion of raw f32 params to the kernel's operand layout/dtypes.

    Hoisted out of the per-call wrapper so repeated inference calls don't
    re-materialize weight copies in HBM.
    """
    return {
        "w1": raw["w1"].astype(jnp.bfloat16),                    # [D, 256]
        "b1": raw["b1"].reshape(1, -1).astype(jnp.float32),      # [1, 256]
        "w2": raw["w2"].astype(jnp.bfloat16),                    # [256, 128]
        "b2": raw["b2"].reshape(1, -1).astype(jnp.float32),      # [1, 128]
        "w3": raw["w3"].reshape(1, -1).astype(jnp.float32),      # [1, 128]
        "b3": raw["b3"].reshape(1, 1).astype(jnp.float32),       # [1, 1]
    }


def reference_forward(x, p):
    """Pure-JAX reference with the same bf16-matmul / f32-accumulate numerics."""
    h1 = jnp.maximum(
        jnp.dot(x.astype(jnp.bfloat16), p["w1"],
                preferred_element_type=jnp.float32) + p["b1"], 0.0)
    h2 = jnp.maximum(
        jnp.dot(h1.astype(jnp.bfloat16), p["w2"],
                preferred_element_type=jnp.float32) + p["b2"], 0.0)
    return jnp.sum(h2 * p["w3"], axis=-1, keepdims=True) + p["b3"]


if __name__ == "__main__":
    key = jax.random.PRNGKey(0)
    k_x, k_p, k_x2 = jax.random.split(key, 3)

    input_dim = 32
    raw = init_params(k_p, input_dim)
    params = prepare_params(raw)   # one-time weight prep, off the call path

    # Small batch: single exact tile.
    batch = 16
    x = jax.random.normal(k_x, (batch, input_dim), jnp.float32)
    out = jax.block_until_ready(delay_predictor_wide_nn(x, params))
    ref = reference_forward(x, params)
    assert out.shape == (batch, 1), out.shape
    assert jnp.allclose(out, ref, atol=1e-2, rtol=1e-2), "mismatch vs reference (small)"

    # Larger, non-multiple batch: multi-step pipelined grid with a ragged last
    # tile (600 rows, TB=256 -> grid=3, last tile only 88 valid rows).
    batch2 = 600
    x2 = jax.random.normal(k_x2, (batch2, input_dim), jnp.float32)
    out2 = jax.block_until_ready(
        delay_predictor_wide_nn(x2, params, block_b=256))
    ref2 = reference_forward(x2, params)
    assert out2.shape == (batch2, 1), out2.shape
    assert jnp.allclose(out2, ref2, atol=1e-2, rtol=1e-2), "mismatch vs reference (large)"

    print("KERNEL_OK")
</pallas_src>

<mosaic_0001>
module attributes {stable_mosaic.version = 11 : i64} {
  func.func @_mlp_kernel(%arg0: i32, %arg1: memref<16x32xf32, #tpu.memory_space<vmem>>, %arg2: memref<32x256xbf16, #tpu.memory_space<vmem>>, %arg3: memref<1x256xf32, #tpu.memory_space<vmem>>, %arg4: memref<256x128xbf16, #tpu.memory_space<vmem>>, %arg5: memref<1x128xf32, #tpu.memory_space<vmem>>, %arg6: memref<1x128xf32, #tpu.memory_space<vmem>>, %arg7: memref<1x1xf32, #tpu.memory_space<vmem>>, %arg8: memref<16x1xf32, #tpu.memory_space<vmem>>) attributes {dimension_semantics = [#tpu.dimension_semantics<parallel>], iteration_bounds = array<i64: 1>, scalar_prefetch = 0 : i64, scratch_operands = 0 : i64, tpu.core_type = #tpu.core_type<tc>, window_params = [{transform_indices = @transform_0, window_bounds = array<i64: 16, 32>}, {pipeline_mode = #tpu.pipeline_mode<synchronous>, transform_indices = @transform_1, window_bounds = array<i64: 32, 256>}, {pipeline_mode = #tpu.pipeline_mode<synchronous>, transform_indices = @transform_2, window_bounds = array<i64: 1, 256>}, {pipeline_mode = #tpu.pipeline_mode<synchronous>, transform_indices = @transform_3, window_bounds = array<i64: 256, 128>}, {pipeline_mode = #tpu.pipeline_mode<synchronous>, transform_indices = @transform_4, window_bounds = array<i64: 1, 128>}, {pipeline_mode = #tpu.pipeline_mode<synchronous>, transform_indices = @transform_5, window_bounds = array<i64: 1, 128>}, {pipeline_mode = #tpu.pipeline_mode<synchronous>, transform_indices = @transform_6, window_bounds = array<i64: 1, 1>}, {transform_indices = @transform_7, window_bounds = array<i64: 16, 1>}]} {
    %c0 = arith.constant 0 : index
    %c0_0 = arith.constant 0 : index
    %0 = vector.load %arg1[%c0, %c0_0] : memref<16x32xf32, #tpu.memory_space<vmem>>, vector<16x32xf32>
    %1 = arith.truncf %0 : vector<16x32xf32> to vector<16x32xbf16>
    %c0_1 = arith.constant 0 : index
    %c0_2 = arith.constant 0 : index
    %2 = vector.load %arg2[%c0_1, %c0_2] : memref<32x256xbf16, #tpu.memory_space<vmem>>, vector<32x256xbf16>
    %cst = arith.constant dense<0.000000e+00> : vector<16x256xf32>
    %3 = tpu.matmul %1, %2, %cst {dimension_numbers = #tpu.dot_dimension_numbers<[1], [0], [0], [1], [0, 0, 1, 1], [], []>} : vector<16x32xbf16>, vector<32x256xbf16>, vector<16x256xf32> -> vector<16x256xf32>
    %c0_3 = arith.constant 0 : index
    %c0_4 = arith.constant 0 : index
    %4 = vector.load %arg3[%c0_3, %c0_4] : memref<1x256xf32, #tpu.memory_space<vmem>>, vector<1x256xf32>
    %5 = vector.broadcast %4 : vector<1x256xf32> to vector<16x256xf32>
    %6 = arith.addf %3, %5 : vector<16x256xf32>
    %cst_5 = arith.constant 0.000000e+00 : f32
    %7 = vector.broadcast %cst_5 : f32 to vector<16x256xf32>
    %8 = arith.maximumf %6, %7 : vector<16x256xf32>
    %9 = arith.truncf %8 : vector<16x256xf32> to vector<16x256xbf16>
    %c0_6 = arith.constant 0 : index
    %c0_7 = arith.constant 0 : index
    %10 = vector.load %arg4[%c0_6, %c0_7] : memref<256x128xbf16, #tpu.memory_space<vmem>>, vector<256x128xbf16>
    %cst_8 = arith.constant dense<0.000000e+00> : vector<16x128xf32>
    %11 = tpu.matmul %9, %10, %cst_8 {dimension_numbers = #tpu.dot_dimension_numbers<[1], [0], [0], [1], [0, 0, 1, 1], [], []>} : vector<16x256xbf16>, vector<256x128xbf16>, vector<16x128xf32> -> vector<16x128xf32>
    %c0_9 = arith.constant 0 : index
    %c0_10 = arith.constant 0 : index
    %12 = vector.load %arg5[%c0_9, %c0_10] : memref<1x128xf32, #tpu.memory_space<vmem>>, vector<1x128xf32>
    %13 = vector.broadcast %12 : vector<1x128xf32> to vector<16x128xf32>
    %14 = arith.addf %11, %13 : vector<16x128xf32>
    %cst_11 = arith.constant 0.000000e+00 : f32
    %15 = vector.broadcast %cst_11 : f32 to vector<16x128xf32>
    %16 = arith.maximumf %14, %15 : vector<16x128xf32>
    %c0_12 = arith.constant 0 : index
    %c0_13 = arith.constant 0 : index
    %17 = vector.load %arg6[%c0_12, %c0_13] : memref<1x128xf32, #tpu.memory_space<vmem>>, vector<1x128xf32>
    %18 = vector.broadcast %17 : vector<1x128xf32> to vector<16x128xf32>
    %19 = arith.mulf %16, %18 : vector<16x128xf32>
    %cst_14 = arith.constant dense<0.000000e+00> : vector<16xf32>
    %20 = vector.multi_reduction <add>, %19, %cst_14 [1] : vector<16x128xf32> to vector<16xf32>
    %21 = vector.shape_cast %20 : vector<16xf32> to vector<16x1xf32>
    %c0_15 = arith.constant 0 : index
    %c0_16 = arith.constant 0 : index
    %22 = vector.load %arg7[%c0_15, %c0_16] : memref<1x1xf32, #tpu.memory_space<vmem>>, vector<1x1xf32>
    %23 = vector.broadcast %22 : vector<1x1xf32> to vector<16x1xf32>
    %24 = arith.addf %21, %23 : vector<16x1xf32>
    %c0_17 = arith.constant 0 : index
    %c0_18 = arith.constant 0 : index
    %25 = vector.load %arg8[%c0_17, %c0_18] : memref<16x1xf32, #tpu.memory_space<vmem>>, vector<16x1xf32>
    tpu.vector_store %arg8[%c0_17, %c0_18], %24 {strides = array<i32>} : memref<16x1xf32, #tpu.memory_space<vmem>>, vector<16x1xf32>,
    return
  }
  func.func @transform_0(%arg0: i32) -> (i32, i32) {
    %c0_i32 = arith.constant 0 : i32
    %c0_i32_0 = arith.constant 0 : i32
    return %arg0, %c0_i32 : i32, i32
  }
  func.func @transform_1(%arg0: i32) -> (i32, i32) {
    %c0_i32 = arith.constant 0 : i32
    %c0_i32_0 = arith.constant 0 : i32
    %c0_i32_1 = arith.constant 0 : i32
    return %c0_i32, %c0_i32_0 : i32, i32
  }
  func.func @transform_2(%arg0: i32) -> (i32, i32) {
    %c0_i32 = arith.constant 0 : i32
    %c0_i32_0 = arith.constant 0 : i32
    %c0_i32_1 = arith.constant 0 : i32
    return %c0_i32, %c0_i32_0 : i32, i32
  }
  func.func @transform_3(%arg0: i32) -> (i32, i32) {
    %c0_i32 = arith.constant 0 : i32
    %c0_i32_0 = arith.constant 0 : i32
    %c0_i32_1 = arith.constant 0 : i32
    return %c0_i32, %c0_i32_0 : i32, i32
  }
  func.func @transform_4(%arg0: i32) -> (i32, i32) {
    %c0_i32 = arith.constant 0 : i32
    %c0_i32_0 = arith.constant 0 : i32
    %c0_i32_1 = arith.constant 0 : i32
    return %c0_i32, %c0_i32_0 : i32, i32
  }
  func.func @transform_5(%arg0: i32) -> (i32, i32) {
    %c0_i32 = arith.constant 0 : i32
    %c0_i32_0 = arith.constant 0 : i32
    %c0_i32_1 = arith.constant 0 : i32
    return %c0_i32, %c0_i32_0 : i32, i32
  }
  func.func @transform_6(%arg0: i32) -> (i32, i32) {
    %c0_i32 = arith.constant 0 : i32
    %c0_i32_0 = arith.constant 0 : i32
    %c0_i32_1 = arith.constant 0 : i32
    return %c0_i32, %c0_i32_0 : i32, i32
  }
  func.func @transform_7(%arg0: i32) -> (i32, i32) {
    %c0_i32 = arith.constant 0 : i32
    %c0_i32_0 = arith.constant 0 : i32
    return %arg0, %c0_i32 : i32, i32
  }
}

</mosaic_0001>

<llo_original>
// kernel: tpu_custom_call.1
$region0: #{tpu_custom_call.1}
  #allocation0 [shape = 'u32[]', space=smem, size = 0x4, offset = 0x4, fixed_abs, tag = 'smem constant byte address 0x4 - core index']
  #allocation1 [shape = 'u32[144,128]{1,0:T(1,128)}', space=vmem, size = 0x12000, scoped, tag = 'internal scratch']
  #allocation2 [shape = 'f32[1,1]{1,0:T(1,128)S(1)}', space=vmem, size = 0x200, scoped, tag = 'scoped memory for tpu_custom_call.1']
  %s0 = inlined_call_operand.hbm [shape: f32[16,32], index: 0, kind: input, shape index: {}]
  %s1 = inlined_call_operand.hbm [shape: bf16[32,256], index: 1, kind: input, shape index: {}]
  %s2 = inlined_call_operand.vmem [shape: f32[1,256], index: 2, kind: input, shape index: {}]
  %s3 = inlined_call_operand.hbm [shape: bf16[256,128], index: 3, kind: input, shape index: {}]
  %s4 = inlined_call_operand.vmem [shape: f32[1,128], index: 4, kind: input, shape index: {}]
  %s5 = inlined_call_operand.vmem [shape: f32[1,128], index: 5, kind: input, shape index: {}]
  %s6 = inlined_call_operand.<no memory space> [shape: f32[1,1], index: 6, kind: input, shape index: {}]
  %s7 = inlined_call_operand.vmem [shape: f32[16,1], index: 7, kind: output, shape index: {}]
  %s8 = sld [smem:[#allocation0]]
  $region50: #{tpu_custom_call.1} parent=0
    _
  %s10 = ssub.s32 1, %s8
  %s11 = scalar_select 0, %s10, %s8
  %v12 = vstv %s6
  %13 = vst [vmem:[#allocation2] sm:$0x1] %v12
  $region1: #{tpu_custom_call.1} parent=0
    #allocation3 [shape = 'u8[8192]{0}', space=vmem, size = 0x2000, scoped, tag = 'input window, operand 0, single buffered']
    #allocation4 [shape = 's32[1]{0}', space=sflag, size = 0x4, scoped, tag = 'scoped memory for tpu_custom_call.1']
    #allocation5 [shape = 'u8[16384]{0}', space=vmem, size = 0x4000, scoped, tag = 'input window, operand 1, single buffered']
    #allocation6 [shape = 's32[1]{0}', space=sflag, size = 0x4, scoped, tag = 'scoped memory for tpu_custom_call.1']
    #allocation7 [shape = 'u8[65536]{0}', space=vmem, size = 0x10000, scoped, tag = 'input window, operand 3, single buffered']
    %14 = vsyncpa [#allocation4], 0
    %15 = vsyncpa [#allocation6], 0
    // Predicated region
    $region2: #{tpu_custom_call.1} parent=1 // pred_check
      _
    $region3: #{tpu_custom_call.1} parent=1 // pred_check_branch
      %17 = sbr.rel (0) target = $region5
    $region4: #{tpu_custom_call.1} parent=1 // pred_region
      %s19 = ssub.s32 256, 256
      %20 = vsyncadd [#allocation4], %s19
      %s21 = sshll.u32 [#allocation3], 4
      %s22 = int_to_ptr.vmem [resolvable:$true] %s21
      %27 = dma.hbm_to_vmem [thread:$0]  %s0, 256, %s22, [#allocation4], 128, 128, 8
    $region5: #{tpu_custom_call.1} parent=1 // pred_fallthru
      _
    // Predicated region
    $region6: #{tpu_custom_call.1} parent=1 // pred_check
      _
    $region7: #{tpu_custom_call.1} parent=1 // pred_check_branch
      %29 = sbr.rel (0) target = $region9
    $region8: #{tpu_custom_call.1} parent=1 // pred_region
      %s31 = ssub.s32 512, 512
      %32 = vsyncadd [#allocation6], %s31
      %s33 = sshll.u32 [#allocation5], 4
      %s34 = int_to_ptr.vmem [resolvable:$true] %s33
      %39 = dma.hbm_to_vmem [thread:$0]  %s1, 512, %s34, [#allocation6], 128, 128, 8
    $region9: #{tpu_custom_call.1} parent=1 // pred_fallthru
      _
    // Predicated region
    $region10: #{tpu_custom_call.1} parent=1 // pred_check
      _
    $region11: #{tpu_custom_call.1} parent=1 // pred_check_branch
      %41 = sbr.rel (0) target = $region13
    $region12: #{tpu_custom_call.1} parent=1 // pred_region
      _
    $region13: #{tpu_custom_call.1} parent=1 // pred_fallthru
      _
    // Predicated region
    $region14: #{tpu_custom_call.1} parent=1 // pred_check
      _
    $region15: #{tpu_custom_call.1} parent=1 // pred_check_branch
      %43 = sbr.rel (0) target = $region17
    $region16: #{tpu_custom_call.1} parent=1 // pred_region
      %s45 = ssub.s32 2048, 2048
      %46 = vsyncadd [#allocation6], %s45
      %s47 = sshll.u32 [#allocation7], 4
      %s48 = int_to_ptr.vmem [resolvable:$true] %s47
      %53 = dma.hbm_to_vmem [thread:$0]  %s3, 2048, %s48, [#allocation6], 64, 64, 4
    $region17: #{tpu_custom_call.1} parent=1 // pred_fallthru
      _
    // Predicated region
    $region18: #{tpu_custom_call.1} parent=1 // pred_check
      _
    $region19: #{tpu_custom_call.1} parent=1 // pred_check_branch
      %55 = sbr.rel (0) target = $region21
    $region20: #{tpu_custom_call.1} parent=1 // pred_region
      _
    $region21: #{tpu_custom_call.1} parent=1 // pred_fallthru
      _
    // Predicated region
    $region22: #{tpu_custom_call.1} parent=1 // pred_check
      _
    $region23: #{tpu_custom_call.1} parent=1 // pred_check_branch
      %57 = sbr.rel (0) target = $region25
    $region24: #{tpu_custom_call.1} parent=1 // pred_region
      _
    $region25: #{tpu_custom_call.1} parent=1 // pred_fallthru
      _
    // Predicated region
    $region26: #{tpu_custom_call.1} parent=1 // pred_check
      _
    $region27: #{tpu_custom_call.1} parent=1 // pred_check_branch
      %59 = sbr.rel (0) target = $region29
    $region28: #{tpu_custom_call.1} parent=1 // pred_region
      _
    $region29: #{tpu_custom_call.1} parent=1 // pred_fallthru
      _
    // Predicated region
    $region30: #{tpu_custom_call.1} parent=1 // pred_check
      _
    $region31: #{tpu_custom_call.1} parent=1 // pred_check_branch
      %61 = sbr.rel (0) target = $region33
    $region32: #{tpu_custom_call.1} parent=1 // pred_region
      %62 = dma.done [#allocation4], 256
    $region33: #{tpu_custom_call.1} parent=1 // pred_fallthru
      _
    // Predicated region
    $region34: #{tpu_custom_call.1} parent=1 // pred_check
      _
    $region35: #{tpu_custom_call.1} parent=1 // pred_check_branch
      %64 = sbr.rel (0) target = $region37
    $region36: #{tpu_custom_call.1} parent=1 // pred_region
      %65 = dma.done [#allocation6], 512
    $region37: #{tpu_custom_call.1} parent=1 // pred_fallthru
      _
    // Predicated region
    $region38: #{tpu_custom_call.1} parent=1 // pred_check
      _
    $region39: #{tpu_custom_call.1} parent=1 // pred_check_branch
      %67 = sbr.rel (0) target = $region41
    $region40: #{tpu_custom_call.1} parent=1 // pred_region
      %68 = dma.done [#allocation6], 2048
    $region41: #{tpu_custom_call.1} parent=1 // pred_fallthru
      _
    %v70 = vld [vmem:[#allocation3] sm:$0xff]
    %v71 = vld [vmem:[#allocation3 + $0x8] sm:$0xff]
    %v72 = vpack.c.bf16 %v71, %v70
    %v73 = vld [vmem:[#allocation5] sm:$0xff]
    %v74 = vld [vmem:[#allocation5 + $0x8] sm:$0xff]
    %v75 = vld [vmem:[#allocation5 + $0x10] sm:$0xff]
    %v76 = vld [vmem:[#allocation5 + $0x18] sm:$0xff]
    %v77 = vld [vmem:[%s2] sm:$0x3]
    %v79 = vlaneseq
    %v80 = vshrl.u32 %v79, 7
    %v81 = vsub.s32 0, %v80
    %v82 = vrot.slane %v77, %v81
    %v83 = vlaneseq
    %v84 = vshrl.u32 %v83, 7
    %v85 = vsub.s32 1, %v84
    %v86 = vrot.slane %v77, %v85
    %v93 = vunpack.c.l.b16 %v73
    %v94 = vunpack.c.h.b16 %v73
    %v95 = vunpack.c.l.b16 %v74
    %v96 = vunpack.c.h.b16 %v74
    %v97 = vunpack.c.l.b16 %v75
    %v98 = vunpack.c.h.b16 %v75
    %v99 = vunpack.c.l.b16 %v76
    %v100 = vunpack.c.h.b16 %v76
    %v101 = vpack.c.b16 %v95, %v93
    %v102 = vpack.c.b16 %v96, %v94
    %v103 = vpack.c.b16 %v99, %v97
    %v104 = vpack.c.b16 %v100, %v98
    %vm109 = vcmask 261120
    %v111 = vsel %vm109, %v72, 0
    %113 = vmatprep.subr.bf16.mxu0 %v102
    %114 = vmatpush1.bf16.msra.mxu0 %v101
    %115 = vmatprep.subr.bf16.mxu0 %v104
    %116 = vmatpush1.bf16.msra.mxu0 %v103
    %117 = vmatprep.subr.bf16.mxu0 0
    %118 = vmatpush1.bf16.msra.mxu0 0
    %119 = vmatprep.subr.bf16.mxu0 0
    %120 = vmatpush1.bf16.msra.mxu0 0
    %121 = vmatprep.subr.bf16.mxu0 0
    %122 = vmatpush1.bf16.msra.mxu0 0
    %123 = vmatprep.subr.bf16.mxu0 0
    %124 = vmatpush1.bf16.msra.mxu0 0
    %125 = vmatprep.subr.bf16.mxu0 0
    %126 = vmatpush1.bf16.msra.mxu0 0
    %127 = vmatprep.subr.bf16.mxu0 0
    %128 = vmatpush1.bf16.msra.mxu0 0
    %129 = vmatprep.subr.bf16.mxu0 0
    %130 = vmatpush1.bf16.msra.mxu0 0
    %131 = vmatprep.subr.bf16.mxu0 0
    %132 = vmatpush1.bf16.msra.mxu0 0
    %133 = vmatprep.subr.bf16.mxu0 0
    %134 = vmatpush1.bf16.msra.mxu0 0
    %135 = vmatprep.subr.bf16.mxu0 0
    %136 = vmatpush1.bf16.msra.mxu0 0
    %137 = vmatprep.subr.bf16.mxu0 0
    %138 = vmatpush1.bf16.msra.mxu0 0
    %139 = vmatprep.subr.bf16.mxu0 0
    %140 = vmatpush1.bf16.msra.mxu0 0
    %141 = vmatprep.subr.bf16.mxu0 0
    %142 = vmatpush1.bf16.msra.mxu0 0
    %143 = vmatprep.subr.bf16.mxu0 0
    %144 = vmatpush1.bf16.msra.mxu0 0
    %145 = vmatprep.mubr.bf16.mxu0 0
    %146 = vmatmul.mubr.bf16.gmra.mrb[0].mxu0 %v111
    %v147 = vpop.f32.mrb[0].mxu0
    %v148 = vadd.f32 %v82, %v147
    %v149 = vpop.f32.mrb[0].mxu0
    %v150 = vadd.f32 %v86, %v149
    %v151 = vpop.f32.mrb[0].mxu0
    %v152 = vadd.f32 %v82, %v151
    %v153 = vpop.f32.mrb[0].mxu0
    %v154 = vadd.f32 %v86, %v153
    %155 = vdwg.mxu0
    %v156 = vmax.f32 %v148, 0.0
    %v157 = vmax.f32 %v150, 0.0
    %v158 = vmax.f32 %v152, 0.0
    %v159 = vmax.f32 %v154, 0.0
    %v160 = vpack.c.bf16 %v158, %v156
    %v161 = vpack.c.bf16 %v159, %v157
    %v162 = vld [vmem:[#allocation7] sm:$0xf]
    %v163 = vld [vmem:[#allocation7 + $0x4] sm:$0xf]
    %v164 = vld [vmem:[#allocation7 + $0x8] sm:$0xf]
    %v165 = vld [vmem:[#allocation7 + $0xc] sm:$0xf]
    %v166 = vld [vmem:[#allocation7 + $0x10] sm:$0xf]
    %v167 = vld [vmem:[#allocation7 + $0x14] sm:$0xf]
    %v168 = vld [vmem:[#allocation7 + $0x18] sm:$0xf]
    %v169 = vld [vmem:[#allocation7 + $0x1c] sm:$0xf]
    %v170 = vld [vmem:[#allocation7 + $0x20] sm:$0xf]
    %v171 = vld [vmem:[#allocation7 + $0x24] sm:$0xf]
    %v172 = vld [vmem:[#allocation7 + $0x28] sm:$0xf]
    %v173 = vld [vmem:[#allocation7 + $0x2c] sm:$0xf]
    %v174 = vld [vmem:[#allocation7 + $0x30] sm:$0xf]
    %v175 = vld [vmem:[#allocation7 + $0x34] sm:$0xf]
    %v176 = vld [vmem:[#allocation7 + $0x38] sm:$0xf]
    %v177 = vld [vmem:[#allocation7 + $0x3c] sm:$0xf]
    %v178 = vld [vmem:[#allocation7 + $0x40] sm:$0xf]
    %v179 = vld [vmem:[#allocation7 + $0x44] sm:$0xf]
    %v180 = vld [vmem:[#allocation7 + $0x48] sm:$0xf]
    %v181 = vld [vmem:[#allocation7 + $0x4c] sm:$0xf]
    %v182 = vld [vmem:[#allocation7 + $0x50] sm:$0xf]
    %v183 = vld [vmem:[#allocation7 + $0x54] sm:$0xf]
    %v184 = vld [vmem:[#allocation7 + $0x58] sm:$0xf]
    %v185 = vld [vmem:[#allocation7 + $0x5c] sm:$0xf]
    %v186 = vld [vmem:[#allocation7 + $0x60] sm:$0xf]
    %v187 = vld [vmem:[#allocation7 + $0x64] sm:$0xf]
    %v188 = vld [vmem:[#allocation7 + $0x68] sm:$0xf]
    %v189 = vld [vmem:[#allocation7 + $0x6c] sm:$0xf]
    %v190 = vld [vmem:[#allocation7 + $0x70] sm:$0xf]
    %v191 = vld [vmem:[#allocation7 + $0x74] sm:$0xf]
    %v192 = vld [vmem:[#allocation7 + $0x78] sm:$0xf]
    %v193 = vld [vmem:[#allocation7 + $0x7c] sm:$0xf]
    %v194 = vld [vmem:[%s4] sm:$0x1]
    %v196 = vlaneseq
    %v197 = vshrl.u32 %v196, 7
    %v198 = vsub.s32 0, %v197
    %v199 = vrot.slane %v194, %v198
    %v233 = vunpack.c.l.b16 %v162
    %v234 = vunpack.c.l.b16 %v163
    %v235 = vunpack.c.l.b16 %v164
    %v236 = vunpack.c.l.b16 %v165
    %v237 = vunpack.c.l.b16 %v166
    %v238 = vunpack.c.l.b16 %v167
    %v239 = vunpack.c.l.b16 %v168
    %v240 = vunpack.c.l.b16 %v169
    %v241 = vunpack.c.l.b16 %v170
    %v242 = vunpack.c.l.b16 %v171
    %v243 = vunpack.c.l.b16 %v172
    %v244 = vunpack.c.l.b16 %v173
    %v245 = vunpack.c.l.b16 %v174
    %v246 = vunpack.c.l.b16 %v175
    %v247 = vunpack.c.l.b16 %v176
    %v248 = vunpack.c.l.b16 %v177
    %v249 = vunpack.c.l.b16 %v178
    %v250 = vunpack.c.l.b16 %v179
    %v251 = vunpack.c.l.b16 %v180
    %v252 = vunpack.c.l.b16 %v181
    %v253 = vunpack.c.l.b16 %v182
    %v254 = vunpack.c.l.b16 %v183
    %v255 = vunpack.c.l.b16 %v184
    %v256 = vunpack.c.l.b16 %v185
    %v257 = vunpack.c.l.b16 %v186
    %v258 = vunpack.c.l.b16 %v187
    %v259 = vunpack.c.l.b16 %v188
    %v260 = vunpack.c.l.b16 %v189
    %v261 = vunpack.c.l.b16 %v190
    %v262 = vunpack.c.l.b16 %v191
    %v263 = vunpack.c.l.b16 %v192
    %v264 = vunpack.c.l.b16 %v193
    %v265 = vpack.c.b16 %v234, %v233
    %v266 = vpack.c.b16 %v236, %v235
    %v267 = vpack.c.b16 %v238, %v237
    %v268 = vpack.c.b16 %v240, %v239
    %v269 = vpack.c.b16 %v242, %v241
    %v270 = vpack.c.b16 %v244, %v243
    %v271 = vpack.c.b16 %v246, %v245
    %v272 = vpack.c.b16 %v248, %v247
    %v273 = vpack.c.b16 %v250, %v249
    %v274 = vpack.c.b16 %v252, %v251
    %v275 = vpack.c.b16 %v254, %v253
    %v276 = vpack.c.b16 %v256, %v255
    %v277 = vpack.c.b16 %v258, %v257
    %v278 = vpack.c.b16 %v260, %v259
    %v279 = vpack.c.b16 %v262, %v261
    %v280 = vpack.c.b16 %v264, %v263
    %297 = vmatprep.subr.bf16.mxu0 0
    %298 = vmatpush1.bf16.msra.mxu0 %v265
    %299 = vmatprep.subr.bf16.mxu0 0
    %300 = vmatpush1.bf16.msra.mxu0 %v266
    %301 = vmatprep.subr.bf16.mxu0 0
    %302 = vmatpush1.bf16.msra.mxu0 %v267
    %303 = vmatprep.subr.bf16.mxu0 0
    %304 = vmatpush1.bf16.msra.mxu0 %v268
    %305 = vmatprep.subr.bf16.mxu0 0
    %306 = vmatpush1.bf16.msra.mxu0 %v269
    %307 = vmatprep.subr.bf16.mxu0 0
    %308 = vmatpush1.bf16.msra.mxu0 %v270
    %309 = vmatprep.subr.bf16.mxu0 0
    %310 = vmatpush1.bf16.msra.mxu0 %v271
    %311 = vmatprep.subr.bf16.mxu0 0
    %312 = vmatpush1.bf16.msra.mxu0 %v272
    %313 = vmatprep.subr.bf16.mxu0 0
    %314 = vmatpush1.bf16.msra.mxu0 %v273
    %315 = vmatprep.subr.bf16.mxu0 0
    %316 = vmatpush1.bf16.msra.mxu0 %v274
    %317 = vmatprep.subr.bf16.mxu0 0
    %318 = vmatpush1.bf16.msra.mxu0 %v275
    %319 = vmatprep.subr.bf16.mxu0 0
    %320 = vmatpush1.bf16.msra.mxu0 %v276
    %321 = vmatprep.subr.bf16.mxu0 0
    %322 = vmatpush1.bf16.msra.mxu0 %v277
    %323 = vmatprep.subr.bf16.mxu0 0
    %324 = vmatpush1.bf16.msra.mxu0 %v278
    %325 = vmatprep.subr.bf16.mxu0 0
    %326 = vmatpush1.bf16.msra.mxu0 %v279
    %327 = vmatprep.subr.bf16.mxu0 0
    %328 = vmatpush1.bf16.msra.mxu0 %v280
    %329 = vmatprep.mubr.bf16.mxu0 %v161
    %330 = vmatmul.mubr.bf16.gmra.mrb[0].mxu0 %v160
    %v331 = vpop.f32.mrb[0].mxu0
    %v332 = vadd.f32 %v199, %v331
    %v333 = vpop.f32.mrb[0].mxu0
    %v334 = vpop.f32.mrb[0].mxu0
    %v335 = vadd.f32 %v199, %v334
    %v336 = vpop.f32.mrb[0].mxu0
    %337 = vdwg.mxu0
    %v338 = vmax.f32 %v332, 0.0
    %v339 = vmax.f32 %v335, 0.0
    %v340 = vld [vmem:[%s5] sm:$0x1]
    %v342 = vlaneseq
    %v343 = vshrl.u32 %v342, 7
    %v344 = vsub.s32 0, %v343
    %v345 = vrot.slane %v340, %v344
    %v347 = vmul.f32 %v338, %v345
    %v348 = vmul.f32 %v339, %v345
    %349 = vadd.xlane.f32.xlu0 %v347
    %v350 = vpop.xlane.xlu0 %349
    %351 = vadd.xlane.f32.xlu0 %v348
    %v352 = vpop.xlane.xlu0 %351
    %v353 = vld [vmem:[#allocation2] sm:$0x1]
    %v355 = vlaneseq
    %v356 = vshrl.u32 %v355, 7
    %v357 = vsub.s32 0, %v356
    %v358 = vrot.slane %v353, %v357
    %v360 = vadd.f32 %v350, %v358
    %v361 = vadd.f32 %v352, %v358
    %vm362 = vcmask 7168
    %363 = vst.msk [vmem:[%s7] sm:$0xff] %vm362, %v360
    %364 = vst.msk [vmem:[%s7 + $0x8] sm:$0xff] %vm362, %v361
    // Predicated region
    $region42: #{tpu_custom_call.1} parent=1 // pred_check
      _
    $region43: #{tpu_custom_call.1} parent=1 // pred_check_branch
      %366 = sbr.rel (0) target = $region45
    $region44: #{tpu_custom_call.1} parent=1 // pred_region
      _
    $region45: #{tpu_custom_call.1} parent=1 // pred_fallthru
      _
    // Predicated region
    $region46: #{tpu_custom_call.1} parent=1 // pred_check
      _
    $region47: #{tpu_custom_call.1} parent=1 // pred_check_branch
      %368 = sbr.rel (0) target = $region49
    $region48: #{tpu_custom_call.1} parent=1 // pred_region
      _
    $region49: #{tpu_custom_call.1} parent=1 // pred_fallthru
      _
    %369 = vsyncpa [#allocation4], 1
    %370 = vsyncpa [#allocation6], 1

</llo_original>
